<compile_context>
chip_gen: v6e
topology: v6e:2x2x1
jax: 0.10.0
libtpu: 0.0.40
codegen_flags: <defaults>
</compile_context>

<pallas_src>
import functools

import jax
import jax.numpy as jnp
from jax.experimental import pallas as pl
from jax.experimental.pallas import tpu as pltpu


def _round_up(x, m):
    return ((x + m - 1) // m) * m


def _critic_kernel(s_ref, a_ref, w1s_ref, w1a_ref, b1_ref, w2_ref, b2_ref,
                   w3_ref, b3_ref, o_ref, *, out_is_scalar):
    # ---- Layer 1: split matmul replaces cat([s, a]) @ W1 -------------------
    # bf16 MXU inputs, f32 accumulation; bias add + ReLU stay in f32 (VPU).
    s16 = s_ref[...].astype(jnp.bfloat16)
    a16 = a_ref[...].astype(jnp.bfloat16)
    h1 = jnp.dot(s16, w1s_ref[...], preferred_element_type=jnp.float32)
    h1 = h1 + jnp.dot(a16, w1a_ref[...], preferred_element_type=jnp.float32)
    h1 = jnp.maximum(h1 + b1_ref[...], 0.0)

    # ---- Layer 2 ------------------------------------------------------------
    h2 = jnp.dot(h1.astype(jnp.bfloat16), w2_ref[...],
                 preferred_element_type=jnp.float32)
    h2 = jnp.maximum(h2 + b2_ref[...], 0.0)

    # ---- Layer 3 ------------------------------------------------------------
    if out_is_scalar:
        # (256 -> 1): VPU multiply + XLU cross-lane reduce; avoids an N=1
        # lane-sparse MXU matmul and its masked partial stores.
        out = jnp.sum(h2 * w3_ref[...], axis=-1, keepdims=True) + b3_ref[...]
    else:
        out = jnp.dot(h2.astype(jnp.bfloat16), w3_ref[...],
                      preferred_element_type=jnp.float32) + b3_ref[...]
    o_ref[...] = out.astype(o_ref.dtype)


def prepare_critic_params(params, state_dim):
    """Convert f32 (in, out)/(1, out) params to the kernel-ready layout once."""
    w1, b1, w2, b2, w3, b3 = params
    out_dim = w3.shape[1]
    w1s = w1[:state_dim].astype(jnp.bfloat16)          # (state_dim, 256)
    w1a = w1[state_dim:].astype(jnp.bfloat16)          # (action_dim, 256)
    if out_dim == 1:
        w3k = w3.reshape(1, -1).astype(jnp.float32)    # (1, 256) row, f32 VPU path
    else:
        w3k = w3.astype(jnp.bfloat16)                  # (256, out_dim) MXU path
    return (w1s, w1a, b1.astype(jnp.float32),
            w2.astype(jnp.bfloat16), b2.astype(jnp.float32),
            w3k, b3.astype(jnp.float32))


def critic_forward(s, a, kernel_params, *, tile_b=128):
    """Pallas implementation of Critic.forward(s, a)."""
    s = s.astype(jnp.float32)
    a = a.astype(jnp.float32)
    w1s, w1a, b1, w2, b2, w3k, b3 = kernel_params

    batch = s.shape[0]
    state_dim = s.shape[1]
    action_dim = a.shape[1]
    out_dim = b3.shape[1]
    out_is_scalar = (out_dim == 1 and w3k.shape[0] == 1)

    # Batch tile: second-to-minor block dim must be a multiple of 8 (or the
    # full array dim). Shrink the tile for tiny batches, pad otherwise.
    tile_b = min(tile_b, max(8, _round_up(batch, 8)))
    padded = _round_up(batch, tile_b)
    if padded != batch:
        s = jnp.pad(s, ((0, padded - batch), (0, 0)))
        a = jnp.pad(a, ((0, padded - batch), (0, 0)))
    grid = (padded // tile_b,)

    batched = lambda i: (i, 0)    # activations: new tile each grid step
    resident = lambda i: (0, 0)   # weights/biases: DMA'd once, stay in VMEM

    kernel = functools.partial(_critic_kernel, out_is_scalar=out_is_scalar)
    out = pl.pallas_call(
        kernel,
        out_shape=jax.ShapeDtypeStruct((padded, out_dim), jnp.float32),
        grid=grid,
        in_specs=[
            pl.BlockSpec((tile_b, state_dim), batched),
            pl.BlockSpec((tile_b, action_dim), batched),
            pl.BlockSpec(w1s.shape, resident),
            pl.BlockSpec(w1a.shape, resident),
            pl.BlockSpec(b1.shape, resident),
            pl.BlockSpec(w2.shape, resident),
            pl.BlockSpec(b2.shape, resident),
            pl.BlockSpec(w3k.shape, resident),
            pl.BlockSpec(b3.shape, resident),
        ],
        out_specs=pl.BlockSpec((tile_b, out_dim), batched),
        compiler_params=pltpu.CompilerParams(
            dimension_semantics=("parallel",)),
    )(s, a, w1s, w1a, b1, w2, b2, w3k, b3)
    return out[:batch]


def init_critic_params(key, input_dim, output_dim, hidden=(256, 256)):
    """Matches torch.nn.Linear default init: U(-1/sqrt(fan_in), 1/sqrt(fan_in)).

    Weights stored as (in, out) so the math is x @ W + b (== x @ W_pt.T + b).
    """
    dims = [input_dim, hidden[0], hidden[1], output_dim]
    params = []
    for i in range(3):
        fan_in, fan_out = dims[i], dims[i + 1]
        key, kw, kb = jax.random.split(key, 3)
        bound = 1.0 / jnp.sqrt(fan_in)
        w = jax.random.uniform(kw, (fan_in, fan_out), jnp.float32, -bound, bound)
        b = jax.random.uniform(kb, (1, fan_out), jnp.float32, -bound, bound)
        params += [w, b]
    return tuple(params)


def critic_reference(s, a, params):
    """Pure-JAX reference matching the kernel's bf16-matmul / f32-accumulate math."""
    x = jnp.concatenate([s, a], axis=1).astype(jnp.float32)
    w1, b1, w2, b2, w3, b3 = params

    def mm(lhs, rhs):
        return jnp.dot(lhs.astype(jnp.bfloat16), rhs.astype(jnp.bfloat16),
                       preferred_element_type=jnp.float32)

    h1 = jnp.maximum(mm(x, w1) + b1, 0.0)
    h2 = jnp.maximum(mm(h1, w2) + b2, 0.0)
    return h2 @ w3 + b3   # final layer stays f32 (matches kernel scalar-out path)


if __name__ == "__main__":
    # DDPG-like shapes: state_dim=24, action_dim=8 -> input_dim=32, Q-value out=1.
    # batch=256 with tile_b=128 -> grid=(2,) so the batch pipeline is exercised.
    batch = 256
    state_dim = 24
    action_dim = 8
    input_dim = state_dim + action_dim
    output_dim = 1

    key = jax.random.PRNGKey(0)
    k_params, k_s, k_a = jax.random.split(key, 3)

    params = init_critic_params(k_params, input_dim, output_dim)
    kparams = prepare_critic_params(params, state_dim)

    s = jax.random.normal(k_s, (batch, state_dim), jnp.float32)
    a = jax.random.normal(k_a, (batch, action_dim), jnp.float32)

    out = jax.block_until_ready(critic_forward(s, a, kparams))
    ref = critic_reference(s, a, params)

    assert out.shape == (batch, output_dim)
    max_err = float(jnp.max(jnp.abs(out - ref)))
    assert jnp.allclose(out, ref, atol=1e-2, rtol=1e-2), (
        f"mismatch vs reference: max abs err {max_err}")

    print("KERNEL_OK")
</pallas_src>

<mosaic_0001>
module attributes {stable_mosaic.version = 11 : i64} {
  func.func @_critic_kernel(%arg0: i32, %arg1: memref<128x24xf32, #tpu.memory_space<vmem>>, %arg2: memref<128x8xf32, #tpu.memory_space<vmem>>, %arg3: memref<24x256xbf16, #tpu.memory_space<vmem>>, %arg4: memref<8x256xbf16, #tpu.memory_space<vmem>>, %arg5: memref<1x256xf32, #tpu.memory_space<vmem>>, %arg6: memref<256x256xbf16, #tpu.memory_space<vmem>>, %arg7: memref<1x256xf32, #tpu.memory_space<vmem>>, %arg8: memref<1x256xf32, #tpu.memory_space<vmem>>, %arg9: memref<1x1xf32, #tpu.memory_space<vmem>>, %arg10: memref<128x1xf32, #tpu.memory_space<vmem>>) attributes {dimension_semantics = [#tpu.dimension_semantics<parallel>], iteration_bounds = array<i64: 2>, scalar_prefetch = 0 : i64, scratch_operands = 0 : i64, tpu.core_type = #tpu.core_type<tc>, window_params = [{transform_indices = @transform_0, window_bounds = array<i64: 128, 24>}, {transform_indices = @transform_1, window_bounds = array<i64: 128, 8>}, {pipeline_mode = #tpu.pipeline_mode<synchronous>, transform_indices = @transform_2, window_bounds = array<i64: 24, 256>}, {pipeline_mode = #tpu.pipeline_mode<synchronous>, transform_indices = @transform_3, window_bounds = array<i64: 8, 256>}, {pipeline_mode = #tpu.pipeline_mode<synchronous>, transform_indices = @transform_4, window_bounds = array<i64: 1, 256>}, {pipeline_mode = #tpu.pipeline_mode<synchronous>, transform_indices = @transform_5, window_bounds = array<i64: 256, 256>}, {pipeline_mode = #tpu.pipeline_mode<synchronous>, transform_indices = @transform_6, window_bounds = array<i64: 1, 256>}, {pipeline_mode = #tpu.pipeline_mode<synchronous>, transform_indices = @transform_7, window_bounds = array<i64: 1, 256>}, {pipeline_mode = #tpu.pipeline_mode<synchronous>, transform_indices = @transform_8, window_bounds = array<i64: 1, 1>}, {transform_indices = @transform_9, window_bounds = array<i64: 128, 1>}]} {
    %c0 = arith.constant 0 : index
    %c0_0 = arith.constant 0 : index
    %0 = vector.load %arg1[%c0, %c0_0] : memref<128x24xf32, #tpu.memory_space<vmem>>, vector<128x24xf32>
    %1 = arith.truncf %0 : vector<128x24xf32> to vector<128x24xbf16>
    %c0_1 = arith.constant 0 : index
    %c0_2 = arith.constant 0 : index
    %2 = vector.load %arg2[%c0_1, %c0_2] : memref<128x8xf32, #tpu.memory_space<vmem>>, vector<128x8xf32>
    %3 = arith.truncf %2 : vector<128x8xf32> to vector<128x8xbf16>
    %c0_3 = arith.constant 0 : index
    %c0_4 = arith.constant 0 : index
    %4 = vector.load %arg3[%c0_3, %c0_4] : memref<24x256xbf16, #tpu.memory_space<vmem>>, vector<24x256xbf16>
    %cst = arith.constant dense<0.000000e+00> : vector<128x256xf32>
    %5 = tpu.matmul %1, %4, %cst {dimension_numbers = #tpu.dot_dimension_numbers<[1], [0], [0], [1], [0, 0, 1, 1], [], []>} : vector<128x24xbf16>, vector<24x256xbf16>, vector<128x256xf32> -> vector<128x256xf32>
    %c0_5 = arith.constant 0 : index
    %c0_6 = arith.constant 0 : index
    %6 = vector.load %arg4[%c0_5, %c0_6] : memref<8x256xbf16, #tpu.memory_space<vmem>>, vector<8x256xbf16>
    %cst_7 = arith.constant dense<0.000000e+00> : vector<128x256xf32>
    %7 = tpu.matmul %3, %6, %cst_7 {dimension_numbers = #tpu.dot_dimension_numbers<[1], [0], [0], [1], [0, 0, 1, 1], [], []>} : vector<128x8xbf16>, vector<8x256xbf16>, vector<128x256xf32> -> vector<128x256xf32>
    %8 = arith.addf %5, %7 : vector<128x256xf32>
    %c0_8 = arith.constant 0 : index
    %c0_9 = arith.constant 0 : index
    %9 = vector.load %arg5[%c0_8, %c0_9] : memref<1x256xf32, #tpu.memory_space<vmem>>, vector<1x256xf32>
    %10 = vector.broadcast %9 : vector<1x256xf32> to vector<128x256xf32>
    %11 = arith.addf %8, %10 : vector<128x256xf32>
    %cst_10 = arith.constant 0.000000e+00 : f32
    %12 = vector.broadcast %cst_10 : f32 to vector<128x256xf32>
    %13 = arith.maximumf %11, %12 : vector<128x256xf32>
    %14 = arith.truncf %13 : vector<128x256xf32> to vector<128x256xbf16>
    %c0_11 = arith.constant 0 : index
    %c0_12 = arith.constant 0 : index
    %15 = vector.load %arg6[%c0_11, %c0_12] : memref<256x256xbf16, #tpu.memory_space<vmem>>, vector<256x256xbf16>
    %cst_13 = arith.constant dense<0.000000e+00> : vector<128x256xf32>
    %16 = tpu.matmul %14, %15, %cst_13 {dimension_numbers = #tpu.dot_dimension_numbers<[1], [0], [0], [1], [0, 0, 1, 1], [], []>} : vector<128x256xbf16>, vector<256x256xbf16>, vector<128x256xf32> -> vector<128x256xf32>
    %c0_14 = arith.constant 0 : index
    %c0_15 = arith.constant 0 : index
    %17 = vector.load %arg7[%c0_14, %c0_15] : memref<1x256xf32, #tpu.memory_space<vmem>>, vector<1x256xf32>
    %18 = vector.broadcast %17 : vector<1x256xf32> to vector<128x256xf32>
    %19 = arith.addf %16, %18 : vector<128x256xf32>
    %cst_16 = arith.constant 0.000000e+00 : f32
    %20 = vector.broadcast %cst_16 : f32 to vector<128x256xf32>
    %21 = arith.maximumf %19, %20 : vector<128x256xf32>
    %c0_17 = arith.constant 0 : index
    %c0_18 = arith.constant 0 : index
    %22 = vector.load %arg8[%c0_17, %c0_18] : memref<1x256xf32, #tpu.memory_space<vmem>>, vector<1x256xf32>
    %23 = vector.broadcast %22 : vector<1x256xf32> to vector<128x256xf32>
    %24 = arith.mulf %21, %23 : vector<128x256xf32>
    %cst_19 = arith.constant dense<0.000000e+00> : vector<128xf32>
    %25 = vector.multi_reduction <add>, %24, %cst_19 [1] : vector<128x256xf32> to vector<128xf32>
    %26 = vector.shape_cast %25 : vector<128xf32> to vector<128x1xf32>
    %c0_20 = arith.constant 0 : index
    %c0_21 = arith.constant 0 : index
    %27 = vector.load %arg9[%c0_20, %c0_21] : memref<1x1xf32, #tpu.memory_space<vmem>>, vector<1x1xf32>
    %28 = vector.broadcast %27 : vector<1x1xf32> to vector<128x1xf32>
    %29 = arith.addf %26, %28 : vector<128x1xf32>
    %c0_22 = arith.constant 0 : index
    %c0_23 = arith.constant 0 : index
    %30 = vector.load %arg10[%c0_22, %c0_23] : memref<128x1xf32, #tpu.memory_space<vmem>>, vector<128x1xf32>
    tpu.vector_store %arg10[%c0_22, %c0_23], %29 {strides = array<i32>} : memref<128x1xf32, #tpu.memory_space<vmem>>, vector<128x1xf32>,
    return
  }
  func.func @transform_0(%arg0: i32) -> (i32, i32) {
    %c0_i32 = arith.constant 0 : i32
    %c0_i32_0 = arith.constant 0 : i32
    return %arg0, %c0_i32 : i32, i32
  }
  func.func @transform_1(%arg0: i32) -> (i32, i32) {
    %c0_i32 = arith.constant 0 : i32
    %c0_i32_0 = arith.constant 0 : i32
    return %arg0, %c0_i32 : i32, i32
  }
  func.func @transform_2(%arg0: i32) -> (i32, i32) {
    %c0_i32 = arith.constant 0 : i32
    %c0_i32_0 = arith.constant 0 : i32
    %c0_i32_1 = arith.constant 0 : i32
    return %c0_i32, %c0_i32_0 : i32, i32
  }
  func.func @transform_3(%arg0: i32) -> (i32, i32) {
    %c0_i32 = arith.constant 0 : i32
    %c0_i32_0 = arith.constant 0 : i32
    %c0_i32_1 = arith.constant 0 : i32
    return %c0_i32, %c0_i32_0 : i32, i32
  }
  func.func @transform_4(%arg0: i32) -> (i32, i32) {
    %c0_i32 = arith.constant 0 : i32
    %c0_i32_0 = arith.constant 0 : i32
    %c0_i32_1 = arith.constant 0 : i32
    return %c0_i32, %c0_i32_0 : i32, i32
  }
  func.func @transform_5(%arg0: i32) -> (i32, i32) {
    %c0_i32 = arith.constant 0 : i32
    %c0_i32_0 = arith.constant 0 : i32
    %c0_i32_1 = arith.constant 0 : i32
    return %c0_i32, %c0_i32_0 : i32, i32
  }
  func.func @transform_6(%arg0: i32) -> (i32, i32) {
    %c0_i32 = arith.constant 0 : i32
    %c0_i32_0 = arith.constant 0 : i32
    %c0_i32_1 = arith.constant 0 : i32
    return %c0_i32, %c0_i32_0 : i32, i32
  }
  func.func @transform_7(%arg0: i32) -> (i32, i32) {
    %c0_i32 = arith.constant 0 : i32
    %c0_i32_0 = arith.constant 0 : i32
    %c0_i32_1 = arith.constant 0 : i32
    return %c0_i32, %c0_i32_0 : i32, i32
  }
  func.func @transform_8(%arg0: i32) -> (i32, i32) {
    %c0_i32 = arith.constant 0 : i32
    %c0_i32_0 = arith.constant 0 : i32
    %c0_i32_1 = arith.constant 0 : i32
    return %c0_i32, %c0_i32_0 : i32, i32
  }
  func.func @transform_9(%arg0: i32) -> (i32, i32) {
    %c0_i32 = arith.constant 0 : i32
    %c0_i32_0 = arith.constant 0 : i32
    return %arg0, %c0_i32 : i32, i32
  }
}

</mosaic_0001>

<llo_original>
// kernel: tpu_custom_call.1
$region0: #{tpu_custom_call.1}
  #allocation0 [shape = 'u32[]', space=smem, size = 0x4, offset = 0x4, fixed_abs, tag = 'smem constant byte address 0x4 - core index']
  #allocation1 [shape = 'u32[144,128]{1,0:T(1,128)}', space=vmem, size = 0x12000, scoped, tag = 'internal scratch']
  #allocation2 [shape = 'f32[1,1]{1,0:T(1,128)S(1)}', space=vmem, size = 0x200, scoped, tag = 'scoped memory for tpu_custom_call.1']
  %s0 = inlined_call_operand.vmem [shape: f32[256,24], index: 0, kind: input, shape index: {}]
  %s1 = inlined_call_operand.vmem [shape: f32[256,8], index: 1, kind: input, shape index: {}]
  %s2 = inlined_call_operand.vmem [shape: bf16[24,256], index: 2, kind: input, shape index: {}]
  %s3 = inlined_call_operand.vmem [shape: bf16[8,256], index: 3, kind: input, shape index: {}]
  %s4 = inlined_call_operand.vmem [shape: f32[1,256], index: 4, kind: input, shape index: {}]
  %s5 = inlined_call_operand.vmem [shape: bf16[256,256], index: 5, kind: input, shape index: {}]
  %s6 = inlined_call_operand.vmem [shape: f32[1,256], index: 6, kind: input, shape index: {}]
  %s7 = inlined_call_operand.vmem [shape: f32[1,256], index: 7, kind: input, shape index: {}]
  %s8 = inlined_call_operand.<no memory space> [shape: f32[1,1], index: 8, kind: input, shape index: {}]
  %s9 = inlined_call_operand.vmem [shape: f32[256,1], index: 9, kind: output, shape index: {}]
  %s10 = sld [smem:[#allocation0]]
  $region69: #{tpu_custom_call.1} parent=0
    _
  %s12 = ssub.s32 1, %s10
  %s13 = scalar_select 0, %s12, %s10
  %v14 = vstv %s8
  %15 = vst [vmem:[#allocation2] sm:$0x1] %v14
  loop: start=0, step=1, limit=4
  $region2: #{tpu_custom_call.1} parent=0 // loop_pre_header
    _
  $region3: #{tpu_custom_call.1} parent=0 // loop_header
    %s17 = sphi 0, %s21
    %p18 = scmp.ge.s32.totalorder %s17, 4
    %s27 = sphi 0, %s29
    %s30 = sphi 0, %s27
    %s31 = sphi 0, %s30
    %s47 = sphi 0, %s31
    %s53 = sphi 0, %s55
    %s56 = sphi 0, %s53
    %s57 = sphi 0, %s56
    %s73 = sphi 0, %s57
    %s77 = sphi 0, %s77
    %s79 = sphi 0, %s77
    %s80 = sphi 0, %s79
    %s94 = sphi 0, %s80
    %s98 = sphi 0, %s98
    %s100 = sphi 0, %s98
    %s101 = sphi 0, %s100
    %s115 = sphi 0, %s101
    %s119 = sphi 0, %s119
    %s121 = sphi 0, %s119
    %s122 = sphi 0, %s121
    %s136 = sphi 0, %s122
    %s140 = sphi 0, %s140
    %s142 = sphi 0, %s140
    %s143 = sphi 0, %s142
    %s157 = sphi 0, %s143
    %s161 = sphi 0, %s161
    %s163 = sphi 0, %s161
    %s164 = sphi 0, %s163
    %s178 = sphi 0, %s164
    %s182 = sphi 0, %s182
    %s184 = sphi 0, %s182
    %s185 = sphi 0, %s184
    %s199 = sphi 0, %s185
    %s203 = sphi 0, %s203
    %s205 = sphi 0, %s203
    %s206 = sphi 0, %s205
    %s220 = sphi 0, %s206
    %s226 = sphi 0, %s228
    %s229 = sphi 0, %s226
    %s230 = sphi 0, %s229
    %s246 = sphi 0, %s230
  $region4: #{tpu_custom_call.1} parent=0 // loop_header_branch
    %20 = sbr.rel (%p18) target = $region8
  $region5: #{tpu_custom_call.1} parent=0 // loop_body
    %s22 = ssub.s32 %s17, 1
    %s23 = ssub.s32 %s17, 2
    %s24 = sadd.s32 %s17, 1
    %s25 = ssub.s32 %s17, %s24
    %p26 = scmp.eq.s32.totalorder %s25, 0
    %s28 = sadd.s32 %s27, 1
    %s29 = scalar_select %p26, %s27, %s28
    %p32 = pneg %p26
    %p33 = scmp.eq.s32.totalorder %s17, 1
    %p34 = por %p32, %p33
    %p35 = scmp.ne.s32.totalorder %s27, %s30
    %p36 = scmp.eq.s32.totalorder %s17, 0
    %p37 = por %p35, %p36
    %p38 = scmp.ne.s32.totalorder %s27, %s30
    %p39 = scmp.eq.s32.totalorder %s22, 1
    %p40 = por %p38, %p39
    %p41 = scmp.ne.s32.totalorder %s30, %s31
    %p42 = scmp.eq.s32.totalorder %s22, 0
    %p43 = por %p41, %p42
    %p44 = scmp.ne.s32.totalorder %s30, %s31
    %p45 = scmp.eq.s32.totalorder %s23, 1
    %p46 = por %p44, %p45
    %p48 = scmp.ne.s32.totalorder %s31, %s47
    %p49 = scmp.eq.s32.totalorder %s23, 0
    %p50 = por %p48, %p49
    %s51 = ssub.s32 %s17, %s24
    %p52 = scmp.eq.s32.totalorder %s51, 0
    %s54 = sadd.s32 %s53, 1
    %s55 = scalar_select %p52, %s53, %s54
    %p58 = pneg %p52
    %p59 = scmp.eq.s32.totalorder %s17, 1
    %p60 = por %p58, %p59
    %p61 = scmp.ne.s32.totalorder %s53, %s56
    %p62 = scmp.eq.s32.totalorder %s17, 0
    %p63 = por %p61, %p62
    %p64 = scmp.ne.s32.totalorder %s53, %s56
    %p65 = scmp.eq.s32.totalorder %s22, 1
    %p66 = por %p64, %p65
    %p67 = scmp.ne.s32.totalorder %s56, %s57
    %p68 = scmp.eq.s32.totalorder %s22, 0
    %p69 = por %p67, %p68
    %p70 = scmp.ne.s32.totalorder %s56, %s57
    %p71 = scmp.eq.s32.totalorder %s23, 1
    %p72 = por %p70, %p71
    %p74 = scmp.ne.s32.totalorder %s57, %s73
    %p75 = scmp.eq.s32.totalorder %s23, 0
    %p76 = por %p74, %p75
    %s78 = sadd.s32 %s77, 1
    %p81 = scmp.eq.s32.totalorder %s17, 1
    %p82 = scmp.ne.s32.totalorder %s77, %s79
    %p83 = scmp.eq.s32.totalorder %s17, 0
    %p84 = por %p82, %p83
    %p85 = scmp.ne.s32.totalorder %s77, %s79
    %p86 = scmp.eq.s32.totalorder %s22, 1
    %p87 = por %p85, %p86
    %p88 = scmp.ne.s32.totalorder %s79, %s80
    %p89 = scmp.eq.s32.totalorder %s22, 0
    %p90 = por %p88, %p89
    %p91 = scmp.ne.s32.totalorder %s79, %s80
    %p92 = scmp.eq.s32.totalorder %s23, 1
    %p93 = por %p91, %p92
    %p95 = scmp.ne.s32.totalorder %s80, %s94
    %p96 = scmp.eq.s32.totalorder %s23, 0
    %p97 = por %p95, %p96
    %s99 = sadd.s32 %s98, 1
    %p102 = scmp.eq.s32.totalorder %s17, 1
    %p103 = scmp.ne.s32.totalorder %s98, %s100
    %p104 = scmp.eq.s32.totalorder %s17, 0
    %p105 = por %p103, %p104
    %p106 = scmp.ne.s32.totalorder %s98, %s100
    %p107 = scmp.eq.s32.totalorder %s22, 1
    %p108 = por %p106, %p107
    %p109 = scmp.ne.s32.totalorder %s100, %s101
    %p110 = scmp.eq.s32.totalorder %s22, 0
    %p111 = por %p109, %p110
    %p112 = scmp.ne.s32.totalorder %s100, %s101
    %p113 = scmp.eq.s32.totalorder %s23, 1
    %p114 = por %p112, %p113
    %p116 = scmp.ne.s32.totalorder %s101, %s115
    %p117 = scmp.eq.s32.totalorder %s23, 0
    %p118 = por %p116, %p117
    %s120 = sadd.s32 %s119, 1
    %p123 = scmp.eq.s32.totalorder %s17, 1
    %p124 = scmp.ne.s32.totalorder %s119, %s121
    %p125 = scmp.eq.s32.totalorder %s17, 0
    %p126 = por %p124, %p125
    %p127 = scmp.ne.s32.totalorder %s119, %s121
    %p128 = scmp.eq.s32.totalorder %s22, 1
    %p129 = por %p127, %p128
    %p130 = scmp.ne.s32.totalorder %s121, %s122
    %p131 = scmp.eq.s32.totalorder %s22, 0
    %p132 = por %p130, %p131
    %p133 = scmp.ne.s32.totalorder %s121, %s122
    %p134 = scmp.eq.s32.totalorder %s23, 1
    %p135 = por %p133, %p134
    %p137 = scmp.ne.s32.totalorder %s122, %s136
    %p138 = scmp.eq.s32.totalorder %s23, 0
    %p139 = por %p137, %p138
    %s141 = sadd.s32 %s140, 1
    %p144 = scmp.eq.s32.totalorder %s17, 1
    %p145 = scmp.ne.s32.totalorder %s140, %s142
    %p146 = scmp.eq.s32.totalorder %s17, 0
    %p147 = por %p145, %p146
    %p148 = scmp.ne.s32.totalorder %s140, %s142
    %p149 = scmp.eq.s32.totalorder %s22, 1
    %p150 = por %p148, %p149
    %p151 = scmp.ne.s32.totalorder %s142, %s143
    %p152 = scmp.eq.s32.totalorder %s22, 0
    %p153 = por %p151, %p152
    %p154 = scmp.ne.s32.totalorder %s142, %s143
    %p155 = scmp.eq.s32.totalorder %s23, 1
    %p156 = por %p154, %p155
    %p158 = scmp.ne.s32.totalorder %s143, %s157
    %p159 = scmp.eq.s32.totalorder %s23, 0
    %p160 = por %p158, %p159
    %s162 = sadd.s32 %s161, 1
    %p165 = scmp.eq.s32.totalorder %s17, 1
    %p166 = scmp.ne.s32.totalorder %s161, %s163
    %p167 = scmp.eq.s32.totalorder %s17, 0
    %p168 = por %p166, %p167
    %p169 = scmp.ne.s32.totalorder %s161, %s163
    %p170 = scmp.eq.s32.totalorder %s22, 1
    %p171 = por %p169, %p170
    %p172 = scmp.ne.s32.totalorder %s163, %s164
    %p173 = scmp.eq.s32.totalorder %s22, 0
    %p174 = por %p172, %p173
    %p175 = scmp.ne.s32.totalorder %s163, %s164
    %p176 = scmp.eq.s32.totalorder %s23, 1
    %p177 = por %p175, %p176
    %p179 = scmp.ne.s32.totalorder %s164, %s178
    %p180 = scmp.eq.s32.totalorder %s23, 0
    %p181 = por %p179, %p180
    %s183 = sadd.s32 %s182, 1
    %p186 = scmp.eq.s32.totalorder %s17, 1
    %p187 = scmp.ne.s32.totalorder %s182, %s184
    %p188 = scmp.eq.s32.totalorder %s17, 0
    %p189 = por %p187, %p188
    %p190 = scmp.ne.s32.totalorder %s182, %s184
    %p191 = scmp.eq.s32.totalorder %s22, 1
    %p192 = por %p190, %p191
    %p193 = scmp.ne.s32.totalorder %s184, %s185
    %p194 = scmp.eq.s32.totalorder %s22, 0
    %p195 = por %p193, %p194
    %p196 = scmp.ne.s32.totalorder %s184, %s185
    %p197 = scmp.eq.s32.totalorder %s23, 1
    %p198 = por %p196, %p197
    %p200 = scmp.ne.s32.totalorder %s185, %s199
    %p201 = scmp.eq.s32.totalorder %s23, 0
    %p202 = por %p200, %p201
    %s204 = sadd.s32 %s203, 1
    %p207 = scmp.eq.s32.totalorder %s17, 1
    %p208 = scmp.ne.s32.totalorder %s203, %s205
    %p209 = scmp.eq.s32.totalorder %s17, 0
    %p210 = por %p208, %p209
    %p211 = scmp.ne.s32.totalorder %s203, %s205
    %p212 = scmp.eq.s32.totalorder %s22, 1
    %p213 = por %p211, %p212
    %p214 = scmp.ne.s32.totalorder %s205, %s206
    %p215 = scmp.eq.s32.totalorder %s22, 0
    %p216 = por %p214, %p215
    %p217 = scmp.ne.s32.totalorder %s205, %s206
    %p218 = scmp.eq.s32.totalorder %s23, 1
    %p219 = por %p217, %p218
    %p221 = scmp.ne.s32.totalorder %s206, %s220
    %p222 = scmp.eq.s32.totalorder %s23, 0
    %p223 = por %p221, %p222
    %s224 = ssub.s32 %s17, %s24
    %p225 = scmp.eq.s32.totalorder %s224, 0
    %s227 = sadd.s32 %s226, 1
    %s228 = scalar_select %p225, %s226, %s227
    %p231 = pneg %p225
    %p232 = scmp.eq.s32.totalorder %s17, 1
    %p233 = por %p231, %p232
    %p234 = scmp.ne.s32.totalorder %s226, %s229
    %p235 = scmp.eq.s32.totalorder %s17, 0
    %p236 = por %p234, %p235
    %p237 = scmp.ne.s32.totalorder %s226, %s229
    %p238 = scmp.eq.s32.totalorder %s22, 1
    %p239 = por %p237, %p238
    %p240 = scmp.ne.s32.totalorder %s229, %s230
    %p241 = scmp.eq.s32.totalorder %s22, 0
    %p242 = por %p240, %p241
    %p243 = scmp.ne.s32.totalorder %s229, %s230
    %p244 = scmp.eq.s32.totalorder %s23, 1
    %p245 = por %p243, %p244
    %p247 = scmp.ne.s32.totalorder %s230, %s246
    %p248 = scmp.eq.s32.totalorder %s23, 0
    %p249 = por %p247, %p248
    %p250 = scmp.le.s32.totalorder 1, %s17
    %p251 = scmp.lt.s32.totalorder %s17, 3
    %p252 = pnand %p250, %p251
    %p253 = pneg %p252
    // Predicated region
    $region9: #{tpu_custom_call.1} parent=5 // pred_check
      _
    $region10: #{tpu_custom_call.1} parent=5 // pred_check_branch
      %255 = sbr.rel (%p252) target = $region12
    $region11: #{tpu_custom_call.1} parent=5 // pred_region
      %s256 = ssub.s32 %s17, 1
      // Predicated region
      $region13: #{tpu_custom_call.1} parent=11 // pred_check
        %p257 = pneg %p90
      $region14: #{tpu_custom_call.1} parent=11 // pred_check_branch
        %259 = sbr.rel (%p257) target = $region16
      $region15: #{tpu_custom_call.1} parent=11 // pred_region
        _
      $region16: #{tpu_custom_call.1} parent=11 // pred_fallthru
        _
      // Predicated region
      $region17: #{tpu_custom_call.1} parent=11 // pred_check
        %p260 = pneg %p111
      $region18: #{tpu_custom_call.1} parent=11 // pred_check_branch
        %262 = sbr.rel (%p260) target = $region20
      $region19: #{tpu_custom_call.1} parent=11 // pred_region
        _
      $region20: #{tpu_custom_call.1} parent=11 // pred_fallthru
        _
      // Predicated region
      $region21: #{tpu_custom_call.1} parent=11 // pred_check
        %p263 = pneg %p132
      $region22: #{tpu_custom_call.1} parent=11 // pred_check_branch
        %265 = sbr.rel (%p263) target = $region24
      $region23: #{tpu_custom_call.1} parent=11 // pred_region
        _
      $region24: #{tpu_custom_call.1} parent=11 // pred_fallthru
        _
      // Predicated region
      $region25: #{tpu_custom_call.1} parent=11 // pred_check
        %p266 = pneg %p153
      $region26: #{tpu_custom_call.1} parent=11 // pred_check_branch
        %268 = sbr.rel (%p266) target = $region28
      $region27: #{tpu_custom_call.1} parent=11 // pred_region
        _
      $region28: #{tpu_custom_call.1} parent=11 // pred_fallthru
        _
      // Predicated region
      $region29: #{tpu_custom_call.1} parent=11 // pred_check
        %p269 = pneg %p174
      $region30: #{tpu_custom_call.1} parent=11 // pred_check_branch
        %271 = sbr.rel (%p269) target = $region32
      $region31: #{tpu_custom_call.1} parent=11 // pred_region
        _
      $region32: #{tpu_custom_call.1} parent=11 // pred_fallthru
        _
      // Predicated region
      $region33: #{tpu_custom_call.1} parent=11 // pred_check
        %p272 = pneg %p195
      $region34: #{tpu_custom_call.1} parent=11 // pred_check_branch
        %274 = sbr.rel (%p272) target = $region36
      $region35: #{tpu_custom_call.1} parent=11 // pred_region
        _
      $region36: #{tpu_custom_call.1} parent=11 // pred_fallthru
        _
      // Predicated region
      $region37: #{tpu_custom_call.1} parent=11 // pred_check
        %p275 = pneg %p216
      $region38: #{tpu_custom_call.1} parent=11 // pred_check_branch
        %277 = sbr.rel (%p275) target = $region40
      $region39: #{tpu_custom_call.1} parent=11 // pred_region
        _
      $region40: #{tpu_custom_call.1} parent=11 // pred_fallthru
        _
    $region12: #{tpu_custom_call.1} parent=5 // pred_fallthru
      _
    %p278 = scmp.lt.s32.totalorder %s17, 2
    // Predicated region
    $region41: #{tpu_custom_call.1} parent=5 // pred_check
      %p279 = pneg %p278
    $region42: #{tpu_custom_call.1} parent=5 // pred_check_branch
      %281 = sbr.rel (%p279) target = $region44
    $region43: #{tpu_custom_call.1} parent=5 // pred_region
      // Predicated region
      $region45: #{tpu_custom_call.1} parent=43 // pred_check
        %p282 = pneg %p37
      $region46: #{tpu_custom_call.1} parent=43 // pred_check_branch
        %284 = sbr.rel (%p282) target = $region48
      $region47: #{tpu_custom_call.1} parent=43 // pred_region
        %s285 = smul.u32 16, %s17
        %p286 = scmp.lt.s32.totalorder %s285, 31
        %s287 = scalar_select %p286, %s285, 31
        %s288 = smul.addr %s287, 8
        %s289 = scalar_lea.vmem %s0, %s288
        %s290 = smul.u32 16, %s17
      $region48: #{tpu_custom_call.1} parent=43 // pred_fallthru
        _
      // Predicated region
      $region49: #{tpu_custom_call.1} parent=43 // pred_check
        %p291 = pneg %p63
      $region50: #{tpu_custom_call.1} parent=43 // pred_check_branch
        %293 = sbr.rel (%p291) target = $region52
      $region51: #{tpu_custom_call.1} parent=43 // pred_region
        %s294 = smul.u32 16, %s17
        %p295 = scmp.lt.s32.totalorder %s294, 31
        %s296 = scalar_select %p295, %s294, 31
        %s297 = smul.addr %s296, 8
        %s298 = scalar_lea.vmem %s1, %s297
        %s299 = smul.u32 16, %s17
      $region52: #{tpu_custom_call.1} parent=43 // pred_fallthru
        _
    $region44: #{tpu_custom_call.1} parent=5 // pred_fallthru
      _
    %p300 = scmp.le.s32.totalorder 1, %s17
    %p301 = scmp.lt.s32.totalorder %s17, 3
    %p302 = pnand %p300, %p301
    %p303 = pneg %p302
    // Predicated region
    $region53: #{tpu_custom_call.1} parent=5 // pred_check
      _
    $region54: #{tpu_custom_call.1} parent=5 // pred_check_branch
      %305 = sbr.rel (%p302) target = $region56
    $region55: #{tpu_custom_call.1} parent=5 // pred_region
      %s306 = ssub.s32 %s17, 1
      %s307 = smul.u32 16, %s22
      %p308 = scmp.lt.s32.totalorder %s307, 31
      %s309 = scalar_select %p308, %s307, 31
      %s310 = smul.addr %s309, 8
      %s311 = scalar_lea.vmem %s0, %s310
      %p312 = pneg %p43
      %p313 = pneg %p40
      %s314 = smul.u32 16, %s22
      %p315 = scmp.lt.s32.totalorder %s314, 31
      %s316 = scalar_select %p315, %s314, 31
      %s317 = smul.addr %s316, 8
      %s318 = scalar_lea.vmem %s1, %s317
      %p319 = pneg %p69
      %p320 = pneg %p66
      %p321 = pneg %p90
      %p322 = pneg %p87
      %p323 = pneg %p111
      %p324 = pneg %p108
      %p325 = pneg %p132
      %p326 = pneg %p129
      %p327 = pneg %p153
      %p328 = pneg %p150
      %p329 = pneg %p174
      %p330 = pneg %p171
      %p331 = pneg %p195
      %p332 = pneg %p192
      %p333 = pneg %p216
      %p334 = pneg %p213
      %p335 = pneg %p242
      %p336 = pneg %p239
      %s337 = smul.u32 16, %s22
      %p338 = scmp.lt.s32.totalorder %s337, 31
      %s339 = scalar_select %p338, %s337, 31
      %s340 = smul.addr %s339, 8
      %s341 = scalar_lea.vmem %s9, %s340
      %s342 = smul.u32 16, %s22
      %p343 = scmp.lt.s32.totalorder %s342, 31
      %s344 = scalar_select %p343, %s342, 31
      %s345 = smul.addr %s344, 8
      %s346 = scalar_lea.vmem %s0, %s345
      %s347 = smul.u32 16, %s22
      %s348 = smul.u32 16, %s22
      %p349 = scmp.lt.s32.totalorder %s348, 31
      %s350 = scalar_select %p349, %s348, 31
      %s351 = smul.addr %s350, 8
      %s352 = scalar_lea.vmem %s1, %s351
      %s353 = smul.u32 16, %s22
      %s354 = smul.u32 16, %s22
      %p355 = scmp.lt.s32.totalorder %s354, 31
      %s356 = scalar_select %p355, %s354, 31
      %s357 = smul.addr %s356, 8
      %s358 = scalar_lea.vmem %s9, %s357
      %s359 = smul.u32 16, %s22
      %v361 = vld [vmem:[%s346] sm:$0xff]
      %v362 = vld [vmem:[%s346 + $0x8] sm:$0xff]
      %v363 = vld [vmem:[%s346 + $0x10] sm:$0xff]
      %v364 = vld [vmem:[%s346 + $0x18] sm:$0xff]
      %v365 = vld [vmem:[%s346 + $0x20] sm:$0xff]
      %v366 = vld [vmem:[%s346 + $0x28] sm:$0xff]
      %v367 = vld [vmem:[%s346 + $0x30] sm:$0xff]
      %v368 = vld [vmem:[%s346 + $0x38] sm:$0xff]
      %v369 = vld [vmem:[%s346 + $0x40] sm:$0xff]
      %v370 = vld [vmem:[%s346 + $0x48] sm:$0xff]
      %v371 = vld [vmem:[%s346 + $0x50] sm:$0xff]
      %v372 = vld [vmem:[%s346 + $0x58] sm:$0xff]
      %v373 = vld [vmem:[%s346 + $0x60] sm:$0xff]
      %v374 = vld [vmem:[%s346 + $0x68] sm:$0xff]
      %v375 = vld [vmem:[%s346 + $0x70] sm:$0xff]
      %v376 = vld [vmem:[%s346 + $0x78] sm:$0xff]
      %v377 = vpack.c.bf16 %v362, %v361
      %v378 = vpack.c.bf16 %v364, %v363
      %v379 = vpack.c.bf16 %v366, %v365
      %v380 = vpack.c.bf16 %v368, %v367
      %v381 = vpack.c.bf16 %v370, %v369
      %v382 = vpack.c.bf16 %v372, %v371
      %v383 = vpack.c.bf16 %v374, %v373
      %v384 = vpack.c.bf16 %v376, %v375
      %v385 = vld [vmem:[%s352] sm:$0xff]
      %v386 = vld [vmem:[%s352 + $0x8] sm:$0xff]
      %v387 = vld [vmem:[%s352 + $0x10] sm:$0xff]
      %v388 = vld [vmem:[%s352 + $0x18] sm:$0xff]
      %v389 = vld [vmem:[%s352 + $0x20] sm:$0xff]
      %v390 = vld [vmem:[%s352 + $0x28] sm:$0xff]
      %v391 = vld [vmem:[%s352 + $0x30] sm:$0xff]
      %v392 = vld [vmem:[%s352 + $0x38] sm:$0xff]
      %v393 = vld [vmem:[%s352 + $0x40] sm:$0xff]
      %v394 = vld [vmem:[%s352 + $0x48] sm:$0xff]
      %v395 = vld [vmem:[%s352 + $0x50] sm:$0xff]
      %v396 = vld [vmem:[%s352 + $0x58] sm:$0xff]
      %v397 = vld [vmem:[%s352 + $0x60] sm:$0xff]
      %v398 = vld [vmem:[%s352 + $0x68] sm:$0xff]
      %v399 = vld [vmem:[%s352 + $0x70] sm:$0xff]
      %v400 = vld [vmem:[%s352 + $0x78] sm:$0xff]
      %v401 = vpack.c.bf16 %v386, %v385
      %v402 = vpack.c.bf16 %v388, %v387
      %v403 = vpack.c.bf16 %v390, %v389
      %v404 = vpack.c.bf16 %v392, %v391
      %v405 = vpack.c.bf16 %v394, %v393
      %v406 = vpack.c.bf16 %v396, %v395
      %v407 = vpack.c.bf16 %v398, %v397
      %v408 = vpack.c.bf16 %v400, %v399
      %v409 = vld [vmem:[%s2] sm:$0xff]
      %v410 = vld [vmem:[%s2 + $0x8] sm:$0xff]
      %v411 = vld [vmem:[%s2 + $0x10] sm:$0xff]
      %v412 = vld [vmem:[%s3] sm:$0xff]
      %v414 = vunpack.c.l.b16 %v412
      %v415 = vunpack.c.h.b16 %v412
      %v416 = vpack.c.b16 %v414, %v414
      %v417 = vpack.c.b16 %v415, %v415
      %vm418 = vcmask 64512
      %v420 = vsel %vm418, %v401, 0
      %v423 = vsel %vm418, %v402, 0
      %v426 = vsel %vm418, %v403, 0
      %v429 = vsel %vm418, %v404, 0
      %v432 = vsel %vm418, %v405, 0
      %v435 = vsel %vm418, %v406, 0
      %v438 = vsel %vm418, %v407, 0
      %v441 = vsel %vm418, %v408, 0
      %vm443 = vcmask 1043456
      %v445 = vsel %vm443, %v416, 0
      %v448 = vsel %vm443, %v417, 0
      %450 = vmatprep.subr.bf16.mxu0 0
      %451 = vmatpush1.bf16.msra.mxu0 0
      %452 = vmatprep.subr.bf16.mxu0 0
      %453 = vmatpush1.bf16.msra.mxu0 0
      %454 = vmatprep.subr.bf16.mxu0 0
      %455 = vmatpush1.bf16.msra.mxu0 0
      %456 = vmatprep.subr.bf16.mxu0 0
      %457 = vmatpush1.bf16.msra.mxu0 0
      %458 = vmatprep.subr.bf16.mxu0 0
      %459 = vmatpush1.bf16.msra.mxu0 0
      %460 = vmatprep.subr.bf16.mxu0 0
      %461 = vmatpush1.bf16.msra.mxu0 0
      %462 = vmatprep.subr.bf16.mxu0 0
      %463 = vmatpush1.bf16.msra.mxu0 0
      %464 = vmatprep.subr.bf16.mxu0 %v448
      %465 = vmatpush1.bf16.msra.mxu0 %v445
      %466 = vmatprep.subr.bf16.mxu0 0
      %467 = vmatpush2.bf16.msra.mxu0 0
      %468 = vmatprep.subr.bf16.mxu0 0
      %469 = vmatpush2.bf16.msra.mxu0 0
      %470 = vmatprep.subr.bf16.mxu0 0
      %471 = vmatpush2.bf16.msra.mxu0 0
      %472 = vmatprep.subr.bf16.mxu0 0
      %473 = vmatpush2.bf16.msra.mxu0 0
      %474 = vmatprep.subr.bf16.mxu0 0
      %475 = vmatpush2.bf16.msra.mxu0 0
      %476 = vmatprep.subr.bf16.mxu0 0
      %477 = vmatpush2.bf16.msra.mxu0 0
      %478 = vmatprep.subr.bf16.mxu0 0
      %479 = vmatpush2.bf16.msra.mxu0 0
      %480 = vmatprep.subr.bf16.mxu0 0
      %481 = vmatpush2.bf16.msra.mxu0 0
      %482 = vmatprep.mubr.bf16.mxu0 0
      %483 = vmatmul.mubr.bf16.gmra.mxu0 %v420
      %v484 = vpop.f32.mrf.mxu0
      %v485 = vadd.f32 0.0, %v484
      %v486 = vpop.f32.mrf.mxu0
      %v487 = vadd.f32 0.0, %v486
      %v488 = vpop.f32.mrf.mxu0
      %v489 = vadd.f32 0.0, %v488
      %v490 = vpop.f32.mrf.mxu0
      %v491 = vadd.f32 0.0, %v490
      %492 = vmatprep.mubr.bf16.mxu0 0
      %493 = vmatmul.mubr.bf16.gmra.mxu0 %v423
      %v494 = vpop.f32.mrf.mxu0
      %v495 = vadd.f32 0.0, %v494
      %v496 = vpop.f32.mrf.mxu0
      %v497 = vadd.f32 0.0, %v496
      %v498 = vpop.f32.mrf.mxu0
      %v499 = vadd.f32 0.0, %v498
      %v500 = vpop.f32.mrf.mxu0
      %v501 = vadd.f32 0.0, %v500
      %502 = vmatprep.mubr.bf16.mxu0 0
      %503 = vmatmul.mubr.bf16.gmra.mxu0 %v426
      %v504 = vpop.f32.mrf.mxu0
      %v505 = vadd.f32 0.0, %v504
      %v506 = vpop.f32.mrf.mxu0
      %v507 = vadd.f32 0.0, %v506
      %v508 = vpop.f32.mrf.mxu0
      %v509 = vadd.f32 0.0, %v508
      %v510 = vpop.f32.mrf.mxu0
      %v511 = vadd.f32 0.0, %v510
      %512 = vmatprep.mubr.bf16.mxu0 0
      %513 = vmatmul.mubr.bf16.gmra.mxu0 %v429
      %v514 = vpop.f32.mrf.mxu0
      %v515 = vadd.f32 0.0, %v514
      %v516 = vpop.f32.mrf.mxu0
      %v517 = vadd.f32 0.0, %v516
      %v518 = vpop.f32.mrf.mxu0
      %v519 = vadd.f32 0.0, %v518
      %v520 = vpop.f32.mrf.mxu0
      %v521 = vadd.f32 0.0, %v520
      %522 = vmatprep.mubr.bf16.mxu0 0
      %523 = vmatmul.mubr.bf16.gmra.mxu0 %v432
      %v524 = vpop.f32.mrf.mxu0
      %v525 = vadd.f32 0.0, %v524
      %v526 = vpop.f32.mrf.mxu0
      %v527 = vadd.f32 0.0, %v526
      %v528 = vpop.f32.mrf.mxu0
      %v529 = vadd.f32 0.0, %v528
      %v530 = vpop.f32.mrf.mxu0
      %v531 = vadd.f32 0.0, %v530
      %532 = vmatprep.mubr.bf16.mxu0 0
      %533 = vmatmul.mubr.bf16.gmra.mxu0 %v435
      %v534 = vpop.f32.mrf.mxu0
      %v535 = vadd.f32 0.0, %v534
      %v536 = vpop.f32.mrf.mxu0
      %v537 = vadd.f32 0.0, %v536
      %v538 = vpop.f32.mrf.mxu0
      %v539 = vadd.f32 0.0, %v538
      %v540 = vpop.f32.mrf.mxu0
      %v541 = vadd.f32 0.0, %v540
      %542 = vmatprep.mubr.bf16.mxu0 0
      %543 = vmatmul.mubr.bf16.gmra.mxu0 %v438
      %v544 = vpop.f32.mrf.mxu0
      %v545 = vadd.f32 0.0, %v544
      %v546 = vpop.f32.mrf.mxu0
      %v547 = vadd.f32 0.0, %v546
      %v548 = vpop.f32.mrf.mxu0
      %v549 = vadd.f32 0.0, %v548
      %v550 = vpop.f32.mrf.mxu0
      %v551 = vadd.f32 0.0, %v550
      %552 = vmatprep.mubr.bf16.mxu0 0
      %553 = vmatmul.mubr.bf16.gmra.mxu0 %v441
      %v554 = vpop.f32.mrf.mxu0
      %v555 = vadd.f32 0.0, %v554
      %v556 = vpop.f32.mrf.mxu0
      %v557 = vadd.f32 0.0, %v556
      %v558 = vpop.f32.mrf.mxu0
      %v559 = vadd.f32 0.0, %v558
      %v560 = vpop.f32.mrf.mxu0
      %v561 = vadd.f32 0.0, %v560
      %562 = vdwg.mxu0
      %v566 = vunpack.c.l.b16 %v409
      %v567 = vunpack.c.h.b16 %v409
      %v568 = vunpack.c.l.b16 %v410
      %v569 = vunpack.c.h.b16 %v410
      %v570 = vunpack.c.l.b16 %v411
      %v571 = vunpack.c.h.b16 %v411
      %v572 = vpack.c.b16 %v568, %v566
      %v573 = vpack.c.b16 %v569, %v567
      %v574 = vpack.c.b16 %v570, %v570
      %v575 = vpack.c.b16 %v571, %v571
      %vm578 = vcmask 195584
      %v580 = vsel %vm578, %v377, 0
      %v583 = vsel %vm578, %v378, 0
      %v586 = vsel %vm578, %v379, 0
      %v589 = vsel %vm578, %v380, 0
      %v592 = vsel %vm578, %v381, 0
      %v595 = vsel %vm578, %v382, 0
      %v598 = vsel %vm578, %v383, 0
      %v601 = vsel %vm578, %v384, 0
      %v604 = vsel %vm443, %v574, 0
      %v607 = vsel %vm443, %v575, 0
      %609 = vmatprep.subr.bf16.mxu0 0
      %610 = vmatpush1.bf16.msra.mxu0 0
      %611 = vmatprep.subr.bf16.mxu0 0
      %612 = vmatpush1.bf16.msra.mxu0 0
      %613 = vmatprep.subr.bf16.mxu0 0
      %614 = vmatpush1.bf16.msra.mxu0 0
      %615 = vmatprep.subr.bf16.mxu0 0
      %616 = vmatpush1.bf16.msra.mxu0 0
      %617 = vmatprep.subr.bf16.mxu0 0
      %618 = vmatpush1.bf16.msra.mxu0 0
      %619 = vmatprep.subr.bf16.mxu0 0
      %620 = vmatpush1.bf16.msra.mxu0 0
      %621 = vmatprep.subr.bf16.mxu0 %v607
      %622 = vmatpush1.bf16.msra.mxu0 %v604
      %623 = vmatprep.subr.bf16.mxu0 %v573
      %624 = vmatpush1.bf16.msra.mxu0 %v572
      %625 = vmatprep.subr.bf16.mxu0 0
      %626 = vmatpush2.bf16.msra.mxu0 0
      %627 = vmatprep.subr.bf16.mxu0 0
      %628 = vmatpush2.bf16.msra.mxu0 0
      %629 = vmatprep.subr.bf16.mxu0 0
      %630 = vmatpush2.bf16.msra.mxu0 0
      %631 = vmatprep.subr.bf16.mxu0 0
      %632 = vmatpush2.bf16.msra.mxu0 0
      %633 = vmatprep.subr.bf16.mxu0 0
      %634 = vmatpush2.bf16.msra.mxu0 0
      %635 = vmatprep.subr.bf16.mxu0 0
      %636 = vmatpush2.bf16.msra.mxu0 0
      %637 = vmatprep.subr.bf16.mxu0 0
      %638 = vmatpush2.bf16.msra.mxu0 0
      %639 = vmatprep.subr.bf16.mxu0 0
      %640 = vmatpush2.bf16.msra.mxu0 0
      %641 = vmatprep.mubr.bf16.mxu0 0
      %642 = vmatmul.mubr.bf16.gmra.mxu0 %v580
      %v643 = vpop.f32.mrf.mxu0
      %v644 = vadd.f32 %v485, %v643
      %v645 = vpop.f32.mrf.mxu0
      %v646 = vadd.f32 %v487, %v645
      %v647 = vpop.f32.mrf.mxu0
      %v648 = vadd.f32 %v489, %v647
      %v649 = vpop.f32.mrf.mxu0
      %v650 = vadd.f32 %v491, %v649
      %651 = vmatprep.mubr.bf16.mxu0 0
      %652 = vmatmul.mubr.bf16.gmra.mxu0 %v583
      %v653 = vpop.f32.mrf.mxu0
      %v654 = vadd.f32 %v495, %v653
      %v655 = vpop.f32.mrf.mxu0
      %v656 = vadd.f32 %v497, %v655
      %v657 = vpop.f32.mrf.mxu0
      %v658 = vadd.f32 %v499, %v657
      %v659 = vpop.f32.mrf.mxu0
      %v660 = vadd.f32 %v501, %v659
      %661 = vmatprep.mubr.bf16.mxu0 0
      %662 = vmatmul.mubr.bf16.gmra.mxu0 %v586
      %v663 = vpop.f32.mrf.mxu0
      %v664 = vadd.f32 %v505, %v663
      %v665 = vpop.f32.mrf.mxu0
      %v666 = vadd.f32 %v507, %v665
      %v667 = vpop.f32.mrf.mxu0
      %v668 = vadd.f32 %v509, %v667
      %v669 = vpop.f32.mrf.mxu0
      %v670 = vadd.f32 %v511, %v669
      %671 = vmatprep.mubr.bf16.mxu0 0
      %672 = vmatmul.mubr.bf16.gmra.mxu0 %v589
      %v673 = vpop.f32.mrf.mxu0
      %v674 = vadd.f32 %v515, %v673
      %v675 = vpop.f32.mrf.mxu0
      %v676 = vadd.f32 %v517, %v675
      %v677 = vpop.f32.mrf.mxu0
      %v678 = vadd.f32 %v519, %v677
      %v679 = vpop.f32.mrf.mxu0
      %v680 = vadd.f32 %v521, %v679
      %681 = vmatprep.mubr.bf16.mxu0 0
      %682 = vmatmul.mubr.bf16.gmra.mxu0 %v592
      %v683 = vpop.f32.mrf.mxu0
      %v684 = vadd.f32 %v525, %v683
      %v685 = vpop.f32.mrf.mxu0
      %v686 = vadd.f32 %v527, %v685
      %v687 = vpop.f32.mrf.mxu0
      %v688 = vadd.f32 %v529, %v687
      %v689 = vpop.f32.mrf.mxu0
      %v690 = vadd.f32 %v531, %v689
      %691 = vmatprep.mubr.bf16.mxu0 0
      %692 = vmatmul.mubr.bf16.gmra.mxu0 %v595
      %v693 = vpop.f32.mrf.mxu0
      %v694 = vadd.f32 %v535, %v693
      %v695 = vpop.f32.mrf.mxu0
      %v696 = vadd.f32 %v537, %v695
      %v697 = vpop.f32.mrf.mxu0
      %v698 = vadd.f32 %v539, %v697
      %v699 = vpop.f32.mrf.mxu0
      %v700 = vadd.f32 %v541, %v699
      %701 = vmatprep.mubr.bf16.mxu0 0
      %702 = vmatmul.mubr.bf16.gmra.mxu0 %v598
      %v703 = vpop.f32.mrf.mxu0
      %v704 = vadd.f32 %v545, %v703
      %v705 = vpop.f32.mrf.mxu0
      %v706 = vadd.f32 %v547, %v705
      %v707 = vpop.f32.mrf.mxu0
      %v708 = vadd.f32 %v549, %v707
      %v709 = vpop.f32.mrf.mxu0
      %v710 = vadd.f32 %v551, %v709
      %711 = vmatprep.mubr.bf16.mxu0 0
      %712 = vmatmul.mubr.bf16.gmra.mxu0 %v601
      %v713 = vpop.f32.mrf.mxu0
      %v714 = vadd.f32 %v555, %v713
      %v715 = vpop.f32.mrf.mxu0
      %v716 = vadd.f32 %v557, %v715
      %v717 = vpop.f32.mrf.mxu0
      %v718 = vadd.f32 %v559, %v717
      %v719 = vpop.f32.mrf.mxu0
      %v720 = vadd.f32 %v561, %v719
      %721 = vdwg.mxu0
      %v722 = vld [vmem:[%s4] sm:$0x3]
      %v724 = vlaneseq
      %v725 = vshrl.u32 %v724, 7
      %v726 = vsub.s32 0, %v725
      %v727 = vrot.slane %v722, %v726
      %v728 = vlaneseq
      %v729 = vshrl.u32 %v728, 7
      %v730 = vsub.s32 1, %v729
      %v731 = vrot.slane %v722, %v730
      %v734 = vadd.f32 %v644, %v727
      %v735 = vadd.f32 %v646, %v731
      %v736 = vadd.f32 %v648, %v727
      %v737 = vadd.f32 %v650, %v731
      %v738 = vadd.f32 %v654, %v727
      %v739 = vadd.f32 %v656, %v731
      %v740 = vadd.f32 %v658, %v727
      %v741 = vadd.f32 %v660, %v731
      %v742 = vadd.f32 %v664, %v727
      %v743 = vadd.f32 %v666, %v731
      %v744 = vadd.f32 %v668, %v727
      %v745 = vadd.f32 %v670, %v731
      %v746 = vadd.f32 %v674, %v727
      %v747 = vadd.f32 %v676, %v731
      %v748 = vadd.f32 %v678, %v727
      %v749 = vadd.f32 %v680, %v731
      %v750 = vadd.f32 %v684, %v727
      %v751 = vadd.f32 %v686, %v731
      %v752 = vadd.f32 %v688, %v727
      %v753 = vadd.f32 %v690, %v731
      %v754 = vadd.f32 %v694, %v727
      %v755 = vadd.f32 %v696, %v731
      %v756 = vadd.f32 %v698, %v727
      %v757 = vadd.f32 %v700, %v731
      %v758 = vadd.f32 %v704, %v727
      %v759 = vadd.f32 %v706, %v731
      %v760 = vadd.f32 %v708, %v727
      %v761 = vadd.f32 %v710, %v731
      %v762 = vadd.f32 %v714, %v727
      %v763 = vadd.f32 %v716, %v731
      %v764 = vadd.f32 %v718, %v727
      %v765 = vadd.f32 %v720, %v731
      %v766 = vmax.f32 %v734, 0.0
      %v767 = vmax.f32 %v735, 0.0
      %v768 = vmax.f32 %v736, 0.0
      %v769 = vmax.f32 %v737, 0.0
      %v770 = vmax.f32 %v738, 0.0
      %v771 = vmax.f32 %v739, 0.0
      %v772 = vmax.f32 %v740, 0.0
      %v773 = vmax.f32 %v741, 0.0
      %v774 = vmax.f32 %v742, 0.0
      %v775 = vmax.f32 %v743, 0.0
      %v776 = vmax.f32 %v744, 0.0
      %v777 = vmax.f32 %v745, 0.0
      %v778 = vmax.f32 %v746, 0.0
      %v779 = vmax.f32 %v747, 0.0
      %v780 = vmax.f32 %v748, 0.0
      %v781 = vmax.f32 %v749, 0.0
      %v782 = vmax.f32 %v750, 0.0
      %v783 = vmax.f32 %v751, 0.0
      %v784 = vmax.f32 %v752, 0.0
      %v785 = vmax.f32 %v753, 0.0
      %v786 = vmax.f32 %v754, 0.0
      %v787 = vmax.f32 %v755, 0.0
      %v788 = vmax.f32 %v756, 0.0
      %v789 = vmax.f32 %v757, 0.0
      %v790 = vmax.f32 %v758, 0.0
      %v791 = vmax.f32 %v759, 0.0
      %v792 = vmax.f32 %v760, 0.0
      %v793 = vmax.f32 %v761, 0.0
      %v794 = vmax.f32 %v762, 0.0
      %v795 = vmax.f32 %v763, 0.0
      %v796 = vmax.f32 %v764, 0.0
      %v797 = vmax.f32 %v765, 0.0
      %v798 = vpack.c.bf16 %v768, %v766
      %v799 = vpack.c.bf16 %v769, %v767
      %v800 = vpack.c.bf16 %v772, %v770
      %v801 = vpack.c.bf16 %v773, %v771
      %v802 = vpack.c.bf16 %v776, %v774
      %v803 = vpack.c.bf16 %v777, %v775
      %v804 = vpack.c.bf16 %v780, %v778
      %v805 = vpack.c.bf16 %v781, %v779
      %v806 = vpack.c.bf16 %v784, %v782
      %v807 = vpack.c.bf16 %v785, %v783
      %v808 = vpack.c.bf16 %v788, %v786
      %v809 = vpack.c.bf16 %v789, %v787
      %v810 = vpack.c.bf16 %v792, %v790
      %v811 = vpack.c.bf16 %v793, %v791
      %v812 = vpack.c.bf16 %v796, %v794
      %v813 = vpack.c.bf16 %v797, %v795
      %v814 = vld [vmem:[%s5] sm:$0xff]
      %v815 = vld [vmem:[%s5 + $0x8] sm:$0xff]
      %v816 = vld [vmem:[%s5 + $0x10] sm:$0xff]
      %v817 = vld [vmem:[%s5 + $0x18] sm:$0xff]
      %v818 = vld [vmem:[%s5 + $0x20] sm:$0xff]
      %v819 = vld [vmem:[%s5 + $0x28] sm:$0xff]
      %v820 = vld [vmem:[%s5 + $0x30] sm:$0xff]
      %v821 = vld [vmem:[%s5 + $0x38] sm:$0xff]
      %v822 = vld [vmem:[%s5 + $0x40] sm:$0xff]
      %v823 = vld [vmem:[%s5 + $0x48] sm:$0xff]
      %v824 = vld [vmem:[%s5 + $0x50] sm:$0xff]
      %v825 = vld [vmem:[%s5 + $0x58] sm:$0xff]
      %v826 = vld [vmem:[%s5 + $0x60] sm:$0xff]
      %v827 = vld [vmem:[%s5 + $0x68] sm:$0xff]
      %v828 = vld [vmem:[%s5 + $0x70] sm:$0xff]
      %v829 = vld [vmem:[%s5 + $0x78] sm:$0xff]
      %v830 = vld [vmem:[%s5 + $0x80] sm:$0xff]
      %v831 = vld [vmem:[%s5 + $0x88] sm:$0xff]
      %v832 = vld [vmem:[%s5 + $0x90] sm:$0xff]
      %v833 = vld [vmem:[%s5 + $0x98] sm:$0xff]
      %v834 = vld [vmem:[%s5 + $0xa0] sm:$0xff]
      %v835 = vld [vmem:[%s5 + $0xa8] sm:$0xff]
      %v836 = vld [vmem:[%s5 + $0xb0] sm:$0xff]
      %v837 = vld [vmem:[%s5 + $0xb8] sm:$0xff]
      %v838 = vld [vmem:[%s5 + $0xc0] sm:$0xff]
      %v839 = vld [vmem:[%s5 + $0xc8] sm:$0xff]
      %v840 = vld [vmem:[%s5 + $0xd0] sm:$0xff]
      %v841 = vld [vmem:[%s5 + $0xd8] sm:$0xff]
      %v842 = vld [vmem:[%s5 + $0xe0] sm:$0xff]
      %v843 = vld [vmem:[%s5 + $0xe8] sm:$0xff]
      %v844 = vld [vmem:[%s5 + $0xf0] sm:$0xff]
      %v845 = vld [vmem:[%s5 + $0xf8] sm:$0xff]
      %v846 = vld [vmem:[%s6] sm:$0x3]
      %v848 = vlaneseq
      %v849 = vshrl.u32 %v848, 7
      %v850 = vsub.s32 0, %v849
      %v851 = vrot.slane %v846, %v850
      %v852 = vlaneseq
      %v853 = vshrl.u32 %v852, 7
      %v854 = vsub.s32 1, %v853
      %v855 = vrot.slane %v846, %v854
      %v890 = vunpack.c.l.b16 %v814
      %v891 = vunpack.c.h.b16 %v814
      %v892 = vunpack.c.l.b16 %v815
      %v893 = vunpack.c.h.b16 %v815
      %v894 = vunpack.c.l.b16 %v816
      %v895 = vunpack.c.h.b16 %v816
      %v896 = vunpack.c.l.b16 %v817
      %v897 = vunpack.c.h.b16 %v817
      %v898 = vunpack.c.l.b16 %v818
      %v899 = vunpack.c.h.b16 %v818
      %v900 = vunpack.c.l.b16 %v819
      %v901 = vunpack.c.h.b16 %v819
      %v902 = vunpack.c.l.b16 %v820
      %v903 = vunpack.c.h.b16 %v820
      %v904 = vunpack.c.l.b16 %v821
      %v905 = vunpack.c.h.b16 %v821
      %v906 = vunpack.c.l.b16 %v822
      %v907 = vunpack.c.h.b16 %v822
      %v908 = vunpack.c.l.b16 %v823
      %v909 = vunpack.c.h.b16 %v823
      %v910 = vunpack.c.l.b16 %v824
      %v911 = vunpack.c.h.b16 %v824
      %v912 = vunpack.c.l.b16 %v825
      %v913 = vunpack.c.h.b16 %v825
      %v914 = vunpack.c.l.b16 %v826
      %v915 = vunpack.c.h.b16 %v826
      %v916 = vunpack.c.l.b16 %v827
      %v917 = vunpack.c.h.b16 %v827
      %v918 = vunpack.c.l.b16 %v828
      %v919 = vunpack.c.h.b16 %v828
      %v920 = vunpack.c.l.b16 %v829
      %v921 = vunpack.c.h.b16 %v829
      %v922 = vunpack.c.l.b16 %v830
      %v923 = vunpack.c.h.b16 %v830
      %v924 = vunpack.c.l.b16 %v831
      %v925 = vunpack.c.h.b16 %v831
      %v926 = vunpack.c.l.b16 %v832
      %v927 = vunpack.c.h.b16 %v832
      %v928 = vunpack.c.l.b16 %v833
      %v929 = vunpack.c.h.b16 %v833
      %v930 = vunpack.c.l.b16 %v834
      %v931 = vunpack.c.h.b16 %v834
      %v932 = vunpack.c.l.b16 %v835
      %v933 = vunpack.c.h.b16 %v835
      %v934 = vunpack.c.l.b16 %v836
      %v935 = vunpack.c.h.b16 %v836
      %v936 = vunpack.c.l.b16 %v837
      %v937 = vunpack.c.h.b16 %v837
      %v938 = vunpack.c.l.b16 %v838
      %v939 = vunpack.c.h.b16 %v838
      %v940 = vunpack.c.l.b16 %v839
      %v941 = vunpack.c.h.b16 %v839
      %v942 = vunpack.c.l.b16 %v840
      %v943 = vunpack.c.h.b16 %v840
      %v944 = vunpack.c.l.b16 %v841
      %v945 = vunpack.c.h.b16 %v841
      %v946 = vunpack.c.l.b16 %v842
      %v947 = vunpack.c.h.b16 %v842
      %v948 = vunpack.c.l.b16 %v843
      %v949 = vunpack.c.h.b16 %v843
      %v950 = vunpack.c.l.b16 %v844
      %v951 = vunpack.c.h.b16 %v844
      %v952 = vunpack.c.l.b16 %v845
      %v953 = vunpack.c.h.b16 %v845
      %v954 = vpack.c.b16 %v892, %v890
      %v955 = vpack.c.b16 %v893, %v891
      %v956 = vpack.c.b16 %v896, %v894
      %v957 = vpack.c.b16 %v897, %v895
      %v958 = vpack.c.b16 %v900, %v898
      %v959 = vpack.c.b16 %v901, %v899
      %v960 = vpack.c.b16 %v904, %v902
      %v961 = vpack.c.b16 %v905, %v903
      %v962 = vpack.c.b16 %v908, %v906
      %v963 = vpack.c.b16 %v909, %v907
      %v964 = vpack.c.b16 %v912, %v910
      %v965 = vpack.c.b16 %v913, %v911
      %v966 = vpack.c.b16 %v916, %v914
      %v967 = vpack.c.b16 %v917, %v915
      %v968 = vpack.c.b16 %v920, %v918
      %v969 = vpack.c.b16 %v921, %v919
      %v970 = vpack.c.b16 %v924, %v922
      %v971 = vpack.c.b16 %v925, %v923
      %v972 = vpack.c.b16 %v928, %v926
      %v973 = vpack.c.b16 %v929, %v927
      %v974 = vpack.c.b16 %v932, %v930
      %v975 = vpack.c.b16 %v933, %v931
      %v976 = vpack.c.b16 %v936, %v934
      %v977 = vpack.c.b16 %v937, %v935
      %v978 = vpack.c.b16 %v940, %v938
      %v979 = vpack.c.b16 %v941, %v939
      %v980 = vpack.c.b16 %v944, %v942
      %v981 = vpack.c.b16 %v945, %v943
      %v982 = vpack.c.b16 %v948, %v946
      %v983 = vpack.c.b16 %v949, %v947
      %v984 = vpack.c.b16 %v952, %v950
      %v985 = vpack.c.b16 %v953, %v951
      %1018 = vmatprep.subr.bf16.mxu0 %v969
      %1019 = vmatpush1.bf16.msra.mxu0 %v968
      %1020 = vmatprep.subr.bf16.mxu0 %v967
      %1021 = vmatpush1.bf16.msra.mxu0 %v966
      %1022 = vmatprep.subr.bf16.mxu0 %v965
      %1023 = vmatpush1.bf16.msra.mxu0 %v964
      %1024 = vmatprep.subr.bf16.mxu0 %v963
      %1025 = vmatpush1.bf16.msra.mxu0 %v962
      %1026 = vmatprep.subr.bf16.mxu0 %v961
      %1027 = vmatpush1.bf16.msra.mxu0 %v960
      %1028 = vmatprep.subr.bf16.mxu0 %v959
      %1029 = vmatpush1.bf16.msra.mxu0 %v958
      %1030 = vmatprep.subr.bf16.mxu0 %v957
      %1031 = vmatpush1.bf16.msra.mxu0 %v956
      %1032 = vmatprep.subr.bf16.mxu0 %v955
      %1033 = vmatpush1.bf16.msra.mxu0 %v954
      %1034 = vmatprep.subr.bf16.mxu0 %v985
      %1035 = vmatpush2.bf16.msra.mxu0 %v984
      %1036 = vmatprep.subr.bf16.mxu0 %v983
      %1037 = vmatpush2.bf16.msra.mxu0 %v982
      %1038 = vmatprep.subr.bf16.mxu0 %v981
      %1039 = vmatpush2.bf16.msra.mxu0 %v980
      %1040 = vmatprep.subr.bf16.mxu0 %v979
      %1041 = vmatpush2.bf16.msra.mxu0 %v978
      %1042 = vmatprep.subr.bf16.mxu0 %v977
      %1043 = vmatpush2.bf16.msra.mxu0 %v976
      %1044 = vmatprep.subr.bf16.mxu0 %v975
      %1045 = vmatpush2.bf16.msra.mxu0 %v974
      %1046 = vmatprep.subr.bf16.mxu0 %v973
      %1047 = vmatpush2.bf16.msra.mxu0 %v972
      %1048 = vmatprep.subr.bf16.mxu0 %v971
      %1049 = vmatpush2.bf16.msra.mxu0 %v970
      %1050 = vmatprep.mubr.bf16.mxu0 %v799
      %1051 = vmatmul.mubr.bf16.gmra.mxu0 %v798
      %v1052 = vpop.f32.mrf.mxu0
      %v1053 = vadd.f32 %v851, %v1052
      %v1054 = vpop.f32.mrf.mxu0
      %v1055 = vadd.f32 %v855, %v1054
      %v1056 = vpop.f32.mrf.mxu0
      %v1057 = vadd.f32 %v851, %v1056
      %v1058 = vpop.f32.mrf.mxu0
      %v1059 = vadd.f32 %v855, %v1058
      %1060 = vmatprep.mubr.bf16.mxu0 %v801
      %1061 = vmatmul.mubr.bf16.gmra.mxu0 %v800
      %v1062 = vpop.f32.mrf.mxu0
      %v1063 = vadd.f32 %v851, %v1062
      %v1064 = vpop.f32.mrf.mxu0
      %v1065 = vadd.f32 %v855, %v1064
      %v1066 = vpop.f32.mrf.mxu0
      %v1067 = vadd.f32 %v851, %v1066
      %v1068 = vpop.f32.mrf.mxu0
      %v1069 = vadd.f32 %v855, %v1068
      %1070 = vmatprep.mubr.bf16.mxu0 %v803
      %1071 = vmatmul.mubr.bf16.gmra.mxu0 %v802
      %v1072 = vpop.f32.mrf.mxu0
      %v1073 = vadd.f32 %v851, %v1072
      %v1074 = vpop.f32.mrf.mxu0
      %v1075 = vadd.f32 %v855, %v1074
      %v1076 = vpop.f32.mrf.mxu0
      %v1077 = vadd.f32 %v851, %v1076
      %v1078 = vpop.f32.mrf.mxu0
      %v1079 = vadd.f32 %v855, %v1078
      %1080 = vmatprep.mubr.bf16.mxu0 %v805
      %1081 = vmatmul.mubr.bf16.gmra.mxu0 %v804
      %v1082 = vpop.f32.mrf.mxu0
      %v1083 = vadd.f32 %v851, %v1082
      %v1084 = vpop.f32.mrf.mxu0
      %v1085 = vadd.f32 %v855, %v1084
      %v1086 = vpop.f32.mrf.mxu0
      %v1087 = vadd.f32 %v851, %v1086
      %v1088 = vpop.f32.mrf.mxu0
      %v1089 = vadd.f32 %v855, %v1088
      %1090 = vmatprep.mubr.bf16.mxu0 %v807
      %1091 = vmatmul.mubr.bf16.gmra.mxu0 %v806
      %v1092 = vpop.f32.mrf.mxu0
      %v1093 = vadd.f32 %v851, %v1092
      %v1094 = vpop.f32.mrf.mxu0
      %v1095 = vadd.f32 %v855, %v1094
      %v1096 = vpop.f32.mrf.mxu0
      %v1097 = vadd.f32 %v851, %v1096
      %v1098 = vpop.f32.mrf.mxu0
      %v1099 = vadd.f32 %v855, %v1098
      %1100 = vmatprep.mubr.bf16.mxu0 %v809
      %1101 = vmatmul.mubr.bf16.gmra.mxu0 %v808
      %v1102 = vpop.f32.mrf.mxu0
      %v1103 = vadd.f32 %v851, %v1102
      %v1104 = vpop.f32.mrf.mxu0
      %v1105 = vadd.f32 %v855, %v1104
      %v1106 = vpop.f32.mrf.mxu0
      %v1107 = vadd.f32 %v851, %v1106
      %v1108 = vpop.f32.mrf.mxu0
      %v1109 = vadd.f32 %v855, %v1108
      %1110 = vmatprep.mubr.bf16.mxu0 %v811
      %1111 = vmatmul.mubr.bf16.gmra.mxu0 %v810
      %v1112 = vpop.f32.mrf.mxu0
      %v1113 = vadd.f32 %v851, %v1112
      %v1114 = vpop.f32.mrf.mxu0
      %v1115 = vadd.f32 %v855, %v1114
      %v1116 = vpop.f32.mrf.mxu0
      %v1117 = vadd.f32 %v851, %v1116
      %v1118 = vpop.f32.mrf.mxu0
      %v1119 = vadd.f32 %v855, %v1118
      %1120 = vmatprep.mubr.bf16.mxu0 %v813
      %1121 = vmatmul.mubr.bf16.gmra.mxu0 %v812
      %v1122 = vpop.f32.mrf.mxu0
      %v1123 = vadd.f32 %v851, %v1122
      %v1124 = vpop.f32.mrf.mxu0
      %v1125 = vadd.f32 %v855, %v1124
      %v1126 = vpop.f32.mrf.mxu0
      %v1127 = vadd.f32 %v851, %v1126
      %v1128 = vpop.f32.mrf.mxu0
      %v1129 = vadd.f32 %v855, %v1128
      %1130 = vdwg.mxu0
      %v1131 = vmax.f32 %v1053, 0.0
      %v1132 = vmax.f32 %v1055, 0.0
      %v1133 = vmax.f32 %v1057, 0.0
      %v1134 = vmax.f32 %v1059, 0.0
      %v1135 = vmax.f32 %v1063, 0.0
      %v1136 = vmax.f32 %v1065, 0.0
      %v1137 = vmax.f32 %v1067, 0.0
      %v1138 = vmax.f32 %v1069, 0.0
      %v1139 = vmax.f32 %v1073, 0.0
      %v1140 = vmax.f32 %v1075, 0.0
      %v1141 = vmax.f32 %v1077, 0.0
      %v1142 = vmax.f32 %v1079, 0.0
      %v1143 = vmax.f32 %v1083, 0.0
      %v1144 = vmax.f32 %v1085, 0.0
      %v1145 = vmax.f32 %v1087, 0.0
      %v1146 = vmax.f32 %v1089, 0.0
      %v1147 = vmax.f32 %v1093, 0.0
      %v1148 = vmax.f32 %v1095, 0.0
      %v1149 = vmax.f32 %v1097, 0.0
      %v1150 = vmax.f32 %v1099, 0.0
      %v1151 = vmax.f32 %v1103, 0.0
      %v1152 = vmax.f32 %v1105, 0.0
      %v1153 = vmax.f32 %v1107, 0.0
      %v1154 = vmax.f32 %v1109, 0.0
      %v1155 = vmax.f32 %v1113, 0.0
      %v1156 = vmax.f32 %v1115, 0.0
      %v1157 = vmax.f32 %v1117, 0.0
      %v1158 = vmax.f32 %v1119, 0.0
      %v1159 = vmax.f32 %v1123, 0.0
      %v1160 = vmax.f32 %v1125, 0.0
      %v1161 = vmax.f32 %v1127, 0.0
      %v1162 = vmax.f32 %v1129, 0.0
      %v1163 = vld [vmem:[%s7] sm:$0x3]
      %v1165 = vlaneseq
      %v1166 = vshrl.u32 %v1165, 7
      %v1167 = vsub.s32 0, %v1166
      %v1168 = vrot.slane %v1163, %v1167
      %v1169 = vlaneseq
      %v1170 = vshrl.u32 %v1169, 7
      %v1171 = vsub.s32 1, %v1170
      %v1172 = vrot.slane %v1163, %v1171
      %v1175 = vmul.f32 %v1131, %v1168
      %v1176 = vmul.f32 %v1132, %v1172
      %v1177 = vmul.f32 %v1133, %v1168
      %v1178 = vmul.f32 %v1134, %v1172
      %v1179 = vmul.f32 %v1135, %v1168
      %v1180 = vmul.f32 %v1136, %v1172
      %v1181 = vmul.f32 %v1137, %v1168
      %v1182 = vmul.f32 %v1138, %v1172
      %v1183 = vmul.f32 %v1139, %v1168
      %v1184 = vmul.f32 %v1140, %v1172
      %v1185 = vmul.f32 %v1141, %v1168
      %v1186 = vmul.f32 %v1142, %v1172
      %v1187 = vmul.f32 %v1143, %v1168
      %v1188 = vmul.f32 %v1144, %v1172
      %v1189 = vmul.f32 %v1145, %v1168
      %v1190 = vmul.f32 %v1146, %v1172
      %v1191 = vmul.f32 %v1147, %v1168
      %v1192 = vmul.f32 %v1148, %v1172
      %v1193 = vmul.f32 %v1149, %v1168
      %v1194 = vmul.f32 %v1150, %v1172
      %v1195 = vmul.f32 %v1151, %v1168
      %v1196 = vmul.f32 %v1152, %v1172
      %v1197 = vmul.f32 %v1153, %v1168
      %v1198 = vmul.f32 %v1154, %v1172
      %v1199 = vmul.f32 %v1155, %v1168
      %v1200 = vmul.f32 %v1156, %v1172
      %v1201 = vmul.f32 %v1157, %v1168
      %v1202 = vmul.f32 %v1158, %v1172
      %v1203 = vmul.f32 %v1159, %v1168
      %v1204 = vmul.f32 %v1160, %v1172
      %v1205 = vmul.f32 %v1161, %v1168
      %v1206 = vmul.f32 %v1162, %v1172
      %v1207 = vadd.f32 %v1175, %v1176
      %1208 = vadd.xlane.f32.xlu0 %v1207
      %v1209 = vpop.xlane.xlu0 %1208
      %v1210 = vadd.f32 %v1177, %v1178
      %1211 = vadd.xlane.f32.xlu0 %v1210
      %v1212 = vpop.xlane.xlu0 %1211
      %v1213 = vadd.f32 %v1179, %v1180
      %1214 = vadd.xlane.f32.xlu0 %v1213
      %v1215 = vpop.xlane.xlu0 %1214
      %v1216 = vadd.f32 %v1181, %v1182
      %1217 = vadd.xlane.f32.xlu0 %v1216
      %v1218 = vpop.xlane.xlu0 %1217
      %v1219 = vadd.f32 %v1183, %v1184
      %1220 = vadd.xlane.f32.xlu0 %v1219
      %v1221 = vpop.xlane.xlu0 %1220
      %v1222 = vadd.f32 %v1185, %v1186
      %1223 = vadd.xlane.f32.xlu0 %v1222
      %v1224 = vpop.xlane.xlu0 %1223
      %v1225 = vadd.f32 %v1187, %v1188
      %1226 = vadd.xlane.f32.xlu0 %v1225
      %v1227 = vpop.xlane.xlu0 %1226
      %v1228 = vadd.f32 %v1189, %v1190
      %1229 = vadd.xlane.f32.xlu0 %v1228
      %v1230 = vpop.xlane.xlu0 %1229
      %v1231 = vadd.f32 %v1191, %v1192
      %1232 = vadd.xlane.f32.xlu0 %v1231
      %v1233 = vpop.xlane.xlu0 %1232
      %v1234 = vadd.f32 %v1193, %v1194
      %1235 = vadd.xlane.f32.xlu0 %v1234
      %v1236 = vpop.xlane.xlu0 %1235
      %v1237 = vadd.f32 %v1195, %v1196
      %1238 = vadd.xlane.f32.xlu0 %v1237
      %v1239 = vpop.xlane.xlu0 %1238
      %v1240 = vadd.f32 %v1197, %v1198
      %1241 = vadd.xlane.f32.xlu0 %v1240
      %v1242 = vpop.xlane.xlu0 %1241
      %v1243 = vadd.f32 %v1199, %v1200
      %1244 = vadd.xlane.f32.xlu0 %v1243
      %v1245 = vpop.xlane.xlu0 %1244
      %v1246 = vadd.f32 %v1201, %v1202
      %1247 = vadd.xlane.f32.xlu0 %v1246
      %v1248 = vpop.xlane.xlu0 %1247
      %v1249 = vadd.f32 %v1203, %v1204
      %1250 = vadd.xlane.f32.xlu0 %v1249
      %v1251 = vpop.xlane.xlu0 %1250
      %v1252 = vadd.f32 %v1205, %v1206
      %1253 = vadd.xlane.f32.xlu0 %v1252
      %v1254 = vpop.xlane.xlu0 %1253
      %v1255 = vld [vmem:[#allocation2] sm:$0x1]
      %v1257 = vlaneseq
      %v1258 = vshrl.u32 %v1257, 7
      %v1259 = vsub.s32 0, %v1258
      %v1260 = vrot.slane %v1255, %v1259
      %v1262 = vadd.f32 %v1209, %v1260
      %v1263 = vadd.f32 %v1212, %v1260
      %v1264 = vadd.f32 %v1215, %v1260
      %v1265 = vadd.f32 %v1218, %v1260
      %v1266 = vadd.f32 %v1221, %v1260
      %v1267 = vadd.f32 %v1224, %v1260
      %v1268 = vadd.f32 %v1227, %v1260
      %v1269 = vadd.f32 %v1230, %v1260
      %v1270 = vadd.f32 %v1233, %v1260
      %v1271 = vadd.f32 %v1236, %v1260
      %v1272 = vadd.f32 %v1239, %v1260
      %v1273 = vadd.f32 %v1242, %v1260
      %v1274 = vadd.f32 %v1245, %v1260
      %v1275 = vadd.f32 %v1248, %v1260
      %v1276 = vadd.f32 %v1251, %v1260
      %v1277 = vadd.f32 %v1254, %v1260
      %vm1278 = vcmask 7168
      %1279 = vst.msk [vmem:[%s358] sm:$0xff] %vm1278, %v1262
      %1280 = vst.msk [vmem:[%s358 + $0x8] sm:$0xff] %vm1278, %v1263
      %1281 = vst.msk [vmem:[%s358 + $0x10] sm:$0xff] %vm1278, %v1264
      %1282 = vst.msk [vmem:[%s358 + $0x18] sm:$0xff] %vm1278, %v1265
      %1283 = vst.msk [vmem:[%s358 + $0x20] sm:$0xff] %vm1278, %v1266
      %1284 = vst.msk [vmem:[%s358 + $0x28] sm:$0xff] %vm1278, %v1267
      %1285 = vst.msk [vmem:[%s358 + $0x30] sm:$0xff] %vm1278, %v1268
      %1286 = vst.msk [vmem:[%s358 + $0x38] sm:$0xff] %vm1278, %v1269
      %1287 = vst.msk [vmem:[%s358 + $0x40] sm:$0xff] %vm1278, %v1270
      %1288 = vst.msk [vmem:[%s358 + $0x48] sm:$0xff] %vm1278, %v1271
      %1289 = vst.msk [vmem:[%s358 + $0x50] sm:$0xff] %vm1278, %v1272
      %1290 = vst.msk [vmem:[%s358 + $0x58] sm:$0xff] %vm1278, %v1273
      %1291 = vst.msk [vmem:[%s358 + $0x60] sm:$0xff] %vm1278, %v1274
      %1292 = vst.msk [vmem:[%s358 + $0x68] sm:$0xff] %vm1278, %v1275
      %1293 = vst.msk [vmem:[%s358 + $0x70] sm:$0xff] %vm1278, %v1276
      %1294 = vst.msk [vmem:[%s358 + $0x78] sm:$0xff] %vm1278, %v1277
      %s1295 = smul.u32 16, %s22
      %p1296 = scmp.lt.s32.totalorder %s1295, 31
      %s1297 = scalar_select %p1296, %s1295, 31
      %s1298 = smul.addr %s1297, 8
      %s1299 = scalar_lea.vmem %s9, %s1298
      // Predicated region
      $region57: #{tpu_custom_call.1} parent=55 // pred_check
        %p1300 = pneg %p239
      $region58: #{tpu_custom_call.1} parent=55 // pred_check_branch
        %1302 = sbr.rel (%p1300) target = $region60
      $region59: #{tpu_custom_call.1} parent=55 // pred_region
        %s1303 = smul.u32 16, %s22
      $region60: #{tpu_custom_call.1} parent=55 // pred_fallthru
        _
    $region56: #{tpu_custom_call.1} parent=5 // pred_fallthru
      _
    %p1304 = scmp.le.s32.totalorder 2, %s17
    // Predicated region
    $region61: #{tpu_custom_call.1} parent=5 // pred_check
      %p1305 = pneg %p1304
    $region62: #{tpu_custom_call.1} parent=5 // pred_check_branch
      %1307 = sbr.rel (%p1305) target = $region64
    $region63: #{tpu_custom_call.1} parent=5 // pred_region
      %s1308 = ssub.s32 %s17, 2
      // Predicated region
      $region65: #{tpu_custom_call.1} parent=63 // pred_check
        %p1309 = pneg %p245
      $region66: #{tpu_custom_call.1} parent=63 // pred_check_branch
        %1311 = sbr.rel (%p1309) target = $region68
      $region67: #{tpu_custom_call.1} parent=63 // pred_region
        %s1312 = smul.u32 16, %s23
        %p1313 = scmp.lt.s32.totalorder %s1312, 31
        %s1314 = scalar_select %p1313, %s1312, 31
        %s1315 = smul.addr %s1314, 8
        %s1316 = scalar_lea.vmem %s9, %s1315
      $region68: #{tpu_custom_call.1} parent=63 // pred_fallthru
        _
    $region64: #{tpu_custom_call.1} parent=5 // pred_fallthru
      _
  $region6: #{tpu_custom_call.1} parent=0 // loop_footer
    %s21 = sadd.s32 1, %s17
  $region7: #{tpu_custom_call.1} parent=0 // loop_footer_branch
    %16 = sbr.rel target = $region3
  $region8: #{tpu_custom_call.1} parent=0 // loop_exit
    _

</llo_original>
